<compile_context>
chip_gen: v5e
topology: v5e:2x2
jax: 0.10.0
libtpu: 0.0.40
codegen_flags: <defaults>
</compile_context>

<pallas_src>
import functools

import jax
import jax.numpy as jnp
from jax.experimental import pallas as pl
from jax.experimental.pallas import tpu as pltpu

LAM = 1.0        # PINNLoss lam
LAM2 = 1.0       # PINNLoss lam2
BETA_MIN = 0.1   # VP-SDE
BETA_MAX = 20.0
_INV_G0 = float(1.0 / (BETA_MIN ** 0.5))   # 1/g(t=0) = 1/sqrt(beta(0))


# ----------------------------- "model" glue ---------------------------------
def sde_beta(t):                      # model.base_sde.beta(t), t: (B,1)
    return BETA_MIN + t * (BETA_MAX - BETA_MIN)


def sde_g(t):                         # model.base_sde.g(t, x) -> (B,1)
    return jnp.sqrt(sde_beta(t))


def initial_condition(x, y):          # deterministic initial-condition fn
    return -x


# ------------------------- fused Pallas kernel -------------------------------
def _pinn_fused_kernel(inp_ref, aux_ref, ph_ref, po_ref, out_ref, *, B, xdim, D, H):
    f32 = jnp.float32
    inp_all = inp_ref[...]              # (2B, D): rows [0:B]=[x|y|0], [B:2B]=[x_t|y|t]
    aux = aux_ref[...]                  # (B, 2*xdim+3): [target | std | g | beta | ic]
    ph = ph_ref[...]                    # (D+2+xdim, H): [W1 ; b1 ; c ; W2^T]
    po = po_ref[...]                    # (2H+1, xdim):  [W2 ; b2 ; W1[:xdim]^T]

    w1 = ph[0:D, :]                     # (D, H)
    b1 = ph[D:D + 1, :]                 # (1, H)
    c = ph[D + 1:D + 2, :]              # (1, H)   c_k = sum_j W1[j,k] W2[k,j], j<xdim
    w2t = ph[D + 2:D + 2 + xdim, :]     # (xdim, H)
    w1t = ph[D - 1:D, :]                # (1, H)   row of W1 feeding the t input
    w2 = po[0:H, :]                     # (H, xdim)
    b2 = po[H:H + 1, :]                 # (1, xdim)
    w1xt = po[H + 1:2 * H + 1, :]       # (H, xdim) = W1[:xdim,:]^T

    # ---- forward MLP, both time points stacked into one tall MXU pass -------
    h_all = jnp.tanh(jnp.dot(inp_all, w1, preferred_element_type=f32) + b1)   # (2B, H)
    a_all = jnp.dot(h_all, w2, preferred_element_type=f32) + b2               # (2B, xdim)

    h = h_all[B:2 * B, :]               # hidden activations at (x_t, y, t)
    a0 = a_all[0:B, :]                  # model.a(x, y, 0)
    at = a_all[B:2 * B, :]              # model.a(x_t, y, t)
    xt = inp_all[B:2 * B, 0:xdim]       # diffused samples

    target = aux[:, 0:xdim]
    std = aux[:, xdim:xdim + 1]
    g = aux[:, xdim + 1:xdim + 2]
    beta = aux[:, xdim + 2:xdim + 3]
    ic_val = aux[:, xdim + 3:2 * xdim + 3]

    inv_g = 1.0 / g
    score = at * inv_g                  # score = model.a(x_t, y, t) / g
    s0 = a0 * _INV_G0                   # s_0   = model.a(x, y, 0) / g(0)

    # ---- analytic derivatives of the 2-layer tanh score network -------------
    # ds_j/d inp_i = (1/g) sum_k W1[i,k] (1-h_k^2) W2[k,j]
    d = 1.0 - h * h                                                            # (B, H)
    ds_dt = jnp.dot(d * w1t, w2, preferred_element_type=f32) * inv_g           # (B, xdim)

    # grad_x of ( div_x s + |s|^2 + x_t·s ):
    #   = (1/g) * [ d ⊙ ( x_t W2^T + 2 s W2^T - 2 h c ) ] @ W1[:xdim]^T  +  s
    s_w2t = jnp.dot(score, w2t, preferred_element_type=f32)                    # (B, H)
    x_w2t = jnp.dot(xt, w2t, preferred_element_type=f32)                       # (B, H)
    m = d * (x_w2t + 2.0 * s_w2t - 2.0 * h * c)
    grad_x = jnp.dot(m, w1xt, preferred_element_type=f32) * inv_g + score      # (B, xdim)

    # ---- losses & batch reductions -------------------------------------------
    dsm = 0.5 * jnp.sum((score * std + target) ** 2, axis=1, keepdims=True)    # DSMLoss
    ic = LAM2 * jnp.mean(jnp.abs(s0 - ic_val), axis=1, keepdims=True)          # L1 IC
    pde = LAM * jnp.mean(jnp.abs(ds_dt - 0.5 * beta * grad_x),                 # L1 FPE
                         axis=1, keepdims=True)

    inv_b = 1.0 / float(B)
    dsm_m = jnp.sum(dsm, axis=0, keepdims=True) * inv_b
    ic_m = jnp.sum(ic, axis=0, keepdims=True) * inv_b
    pde_m = jnp.sum(pde, axis=0, keepdims=True) * inv_b
    loss = dsm_m + ic_m + pde_m         # == mean of the torch (B,B) broadcast

    # single lane-dense output row: [loss, pde, ic, dsm, 0, ...]
    lane = jax.lax.broadcasted_iota(jnp.int32, (1, 128), 1)
    out_ref[...] = (jnp.where(lane == 0, loss, 0.0)
                    + jnp.where(lane == 1, pde_m, 0.0)
                    + jnp.where(lane == 2, ic_m, 0.0)
                    + jnp.where(lane == 3, dsm_m, 0.0))


# ------------------------------ PINNLoss.forward -----------------------------
def pinn_loss_forward(params, x, y, diffused_samples, t, target, std, g):
    W1, b1, W2, b2 = params
    B, xdim = x.shape
    ydim = y.shape[1]
    D = xdim + ydim + 1
    H = W1.shape[1]
    f32 = jnp.float32

    t0 = jnp.zeros_like(t)
    beta = sde_beta(t)
    ic_val = initial_condition(x, y)

    # Packed, lane/sublane-dense kernel inputs (built once by XLA in the wrapper).
    inp_all = jnp.concatenate(
        [jnp.concatenate([x, y, t0], axis=1),
         jnp.concatenate([diffused_samples, y, t], axis=1)], axis=0).astype(f32)      # (2B, D)
    aux = jnp.concatenate([target, std, g, beta, ic_val], axis=1).astype(f32)         # (B, 2*xdim+3)
    c = jnp.sum(W1[:xdim, :] * W2.T, axis=0, keepdims=True)                           # (1, H)
    ph = jnp.concatenate([W1, b1.reshape(1, -1), c, W2.T], axis=0).astype(f32)        # (D+2+xdim, H)
    po = jnp.concatenate([W2, b2.reshape(1, -1), W1[:xdim, :].T], axis=0).astype(f32) # (2H+1, xdim)

    kernel = functools.partial(_pinn_fused_kernel, B=B, xdim=xdim, D=D, H=H)
    vmem = pl.BlockSpec(memory_space=pltpu.MemorySpace.VMEM)
    # NOTE: at B=8 a single blockless call is optimal; for training-size batches,
    # tile the batch axis with a grid + VMEM accumulator (pl.when init/finalize).
    out = pl.pallas_call(
        kernel,
        out_shape=jax.ShapeDtypeStruct((1, 128), jnp.float32),
        in_specs=[vmem, vmem, vmem, vmem],
        out_specs=vmem,
    )(inp_all, aux, ph, po)

    return out[0, 0], {
        'PDE-Loss': out[0, 1],
        'Initial Condition': out[0, 2],
        'DSM-Loss': out[0, 3],
    }


# ------------------- pure-JAX autodiff reference (for checking) --------------
def _reference_forward(params, x, y, xt, t, target, std, g):
    W1, b1, W2, b2 = params

    def a_fn(inp):
        return jnp.tanh(inp @ W1 + b1) @ W2 + b2

    def score_single(xb, yb, tb, gb):
        return a_fn(jnp.concatenate([xb, yb, tb])) / gb

    score = jax.vmap(score_single)(xt, y, t, g)
    t0 = jnp.zeros_like(t)
    g0 = jnp.sqrt(jnp.asarray(BETA_MIN, jnp.float32))
    s0 = (jnp.tanh(jnp.concatenate([x, y, t0], axis=1) @ W1 + b1) @ W2 + b2) / g0
    beta = BETA_MIN + t * (BETA_MAX - BETA_MIN)

    def dsdt_single(xb, yb, tb, gb):
        return jax.jacfwd(lambda tt: score_single(xb, yb, tt, gb))(tb)[:, 0]

    def gradx_single(xb, yb, tb, gb):
        def F(xx):
            s = score_single(xx, yb, tb, gb)
            J = jax.jacfwd(lambda zz: score_single(zz, yb, tb, gb))(xx)
            return jnp.trace(J) + jnp.sum(s ** 2) + jnp.dot(xx, s)
        return jax.grad(F)(xb)

    ds_dt = jax.vmap(dsdt_single)(xt, y, t, g)
    grad_x = jax.vmap(gradx_single)(xt, y, t, g)

    dsm = 0.5 * jnp.sum((score * std + target) ** 2, axis=1)
    ic = LAM2 * jnp.mean(jnp.abs(s0 - initial_condition(x, y)), axis=1)
    pde = LAM * jnp.mean(jnp.abs(ds_dt - 0.5 * beta * grad_x), axis=1)
    loss = jnp.mean(dsm) + jnp.mean(ic) + jnp.mean(pde)
    return loss, pde.mean(), ic.mean(), dsm.mean()


# ---------------------------------- main -------------------------------------
if __name__ == "__main__":
    key = jax.random.PRNGKey(0)
    ks = jax.random.split(key, 10)
    B, XDIM, YDIM, HID = 8, 4, 3, 32

    x = jax.random.normal(ks[0], (B, XDIM), jnp.float32)
    y = jax.random.normal(ks[1], (B, YDIM), jnp.float32)
    diffused = jax.random.normal(ks[2], (B, XDIM), jnp.float32)
    t = jax.random.uniform(ks[3], (B, 1), jnp.float32, 0.05, 1.0)
    target = jax.random.normal(ks[4], (B, XDIM), jnp.float32)
    std = jax.random.uniform(ks[5], (B, 1), jnp.float32, 0.1, 1.0)
    g = sde_g(t)

    # deterministic model params (model.a: MLP [xdim+ydim+1] -> HID -> xdim)
    W1 = 0.3 * jax.random.normal(ks[6], (XDIM + YDIM + 1, HID), jnp.float32)
    b1 = 0.1 * jax.random.normal(ks[7], (HID,), jnp.float32)
    W2 = 0.3 * jax.random.normal(ks[8], (HID, XDIM), jnp.float32)
    b2 = 0.1 * jax.random.normal(ks[9], (XDIM,), jnp.float32)
    params = (W1, b1, W2, b2)

    loss, parts = jax.jit(pinn_loss_forward)(
        params, x, y, diffused, t, target, std, g)
    jax.block_until_ready(loss)
    jax.block_until_ready(parts)

    # correctness check of the analytic in-kernel derivatives vs JAX autodiff
    ref = jax.jit(_reference_forward)(params, x, y, diffused, t, target, std, g)
    got = [float(loss), float(parts['PDE-Loss']),
           float(parts['Initial Condition']), float(parts['DSM-Loss'])]
    want = [float(v) for v in ref]
    for name, a, b in zip(("loss", "pde", "ic", "dsm"), got, want):
        if abs(a - b) > 1e-3 + 1e-3 * abs(b):
            raise AssertionError(f"mismatch {name}: kernel={a} reference={b}")

    print("KERNEL_OK")
</pallas_src>

<mosaic_0001>
module attributes {stable_mosaic.version = 11 : i64} {
  func.func @_pinn_fused_kernel(%arg0: memref<16x8xf32, #tpu.memory_space<vmem>>, %arg1: memref<8x11xf32, #tpu.memory_space<vmem>>, %arg2: memref<14x32xf32, #tpu.memory_space<vmem>>, %arg3: memref<65x4xf32, #tpu.memory_space<vmem>>, %arg4: memref<1x128xf32, #tpu.memory_space<vmem>>) attributes {dimension_semantics = [], scalar_prefetch = 0 : i64, scratch_operands = 0 : i64, tpu.core_type = #tpu.core_type<tc>} {
    %c0 = arith.constant 0 : index
    %c0_0 = arith.constant 0 : index
    %0 = vector.load %arg0[%c0, %c0_0] : memref<16x8xf32, #tpu.memory_space<vmem>>, vector<16x8xf32>
    %c0_1 = arith.constant 0 : index
    %c0_2 = arith.constant 0 : index
    %1 = vector.load %arg1[%c0_1, %c0_2] : memref<8x11xf32, #tpu.memory_space<vmem>>, vector<8x11xf32>
    %c0_3 = arith.constant 0 : index
    %c0_4 = arith.constant 0 : index
    %2 = vector.load %arg2[%c0_3, %c0_4] : memref<14x32xf32, #tpu.memory_space<vmem>>, vector<14x32xf32>
    %c0_5 = arith.constant 0 : index
    %c0_6 = arith.constant 0 : index
    %3 = vector.load %arg3[%c0_5, %c0_6] : memref<65x4xf32, #tpu.memory_space<vmem>>, vector<65x4xf32>
    %4 = vector.extract_strided_slice %2 {offsets = [0, 0], sizes = [8, 32], strides = [1, 1]} : vector<14x32xf32> to vector<8x32xf32>
    %5 = vector.extract_strided_slice %2 {offsets = [8, 0], sizes = [1, 32], strides = [1, 1]} : vector<14x32xf32> to vector<1x32xf32>
    %6 = vector.extract_strided_slice %2 {offsets = [9, 0], sizes = [1, 32], strides = [1, 1]} : vector<14x32xf32> to vector<1x32xf32>
    %7 = vector.extract_strided_slice %2 {offsets = [10, 0], sizes = [4, 32], strides = [1, 1]} : vector<14x32xf32> to vector<4x32xf32>
    %8 = vector.extract_strided_slice %2 {offsets = [7, 0], sizes = [1, 32], strides = [1, 1]} : vector<14x32xf32> to vector<1x32xf32>
    %9 = vector.extract_strided_slice %3 {offsets = [0, 0], sizes = [32, 4], strides = [1, 1]} : vector<65x4xf32> to vector<32x4xf32>
    %10 = vector.extract_strided_slice %3 {offsets = [32, 0], sizes = [1, 4], strides = [1, 1]} : vector<65x4xf32> to vector<1x4xf32>
    %11 = vector.extract_strided_slice %3 {offsets = [33, 0], sizes = [32, 4], strides = [1, 1]} : vector<65x4xf32> to vector<32x4xf32>
    %cst = arith.constant dense<0.000000e+00> : vector<16x32xf32>
    %12 = tpu.matmul %0, %4, %cst {dimension_numbers = #tpu.dot_dimension_numbers<[1], [0], [0], [1], [0, 0, 1, 1], [], []>} : vector<16x8xf32>, vector<8x32xf32>, vector<16x32xf32> -> vector<16x32xf32>
    %13 = vector.broadcast %5 : vector<1x32xf32> to vector<16x32xf32>
    %14 = arith.addf %12, %13 : vector<16x32xf32>
    %15 = math.tanh %14 : vector<16x32xf32>
    %cst_7 = arith.constant dense<0.000000e+00> : vector<16x4xf32>
    %16 = tpu.matmul %15, %9, %cst_7 {dimension_numbers = #tpu.dot_dimension_numbers<[1], [0], [0], [1], [0, 0, 1, 1], [], []>} : vector<16x32xf32>, vector<32x4xf32>, vector<16x4xf32> -> vector<16x4xf32>
    %17 = vector.broadcast %10 : vector<1x4xf32> to vector<16x4xf32>
    %18 = arith.addf %16, %17 : vector<16x4xf32>
    %19 = vector.extract_strided_slice %15 {offsets = [8, 0], sizes = [8, 32], strides = [1, 1]} : vector<16x32xf32> to vector<8x32xf32>
    %20 = vector.extract_strided_slice %18 {offsets = [0, 0], sizes = [8, 4], strides = [1, 1]} : vector<16x4xf32> to vector<8x4xf32>
    %21 = vector.extract_strided_slice %18 {offsets = [8, 0], sizes = [8, 4], strides = [1, 1]} : vector<16x4xf32> to vector<8x4xf32>
    %22 = vector.extract_strided_slice %0 {offsets = [8, 0], sizes = [8, 4], strides = [1, 1]} : vector<16x8xf32> to vector<8x4xf32>
    %23 = vector.extract_strided_slice %1 {offsets = [0, 0], sizes = [8, 4], strides = [1, 1]} : vector<8x11xf32> to vector<8x4xf32>
    %24 = vector.extract_strided_slice %1 {offsets = [0, 4], sizes = [8, 1], strides = [1, 1]} : vector<8x11xf32> to vector<8x1xf32>
    %25 = vector.extract_strided_slice %1 {offsets = [0, 5], sizes = [8, 1], strides = [1, 1]} : vector<8x11xf32> to vector<8x1xf32>
    %26 = vector.extract_strided_slice %1 {offsets = [0, 6], sizes = [8, 1], strides = [1, 1]} : vector<8x11xf32> to vector<8x1xf32>
    %27 = vector.extract_strided_slice %1 {offsets = [0, 7], sizes = [8, 4], strides = [1, 1]} : vector<8x11xf32> to vector<8x4xf32>
    %cst_8 = arith.constant 1.000000e+00 : f32
    %28 = vector.broadcast %cst_8 : f32 to vector<8x1xf32>
    %29 = arith.divf %28, %25 : vector<8x1xf32>
    %30 = vector.broadcast %29 : vector<8x1xf32> to vector<8x4xf32>
    %31 = arith.mulf %21, %30 : vector<8x4xf32>
    %cst_9 = arith.constant 3.1622777 : f32
    %32 = vector.broadcast %cst_9 : f32 to vector<8x4xf32>
    %33 = arith.mulf %20, %32 : vector<8x4xf32>
    %34 = arith.mulf %19, %19 : vector<8x32xf32>
    %cst_10 = arith.constant 1.000000e+00 : f32
    %35 = vector.broadcast %cst_10 : f32 to vector<8x32xf32>
    %36 = arith.subf %35, %34 : vector<8x32xf32>
    %37 = vector.broadcast %8 : vector<1x32xf32> to vector<8x32xf32>
    %38 = arith.mulf %36, %37 : vector<8x32xf32>
    %cst_11 = arith.constant dense<0.000000e+00> : vector<8x4xf32>
    %39 = tpu.matmul %38, %9, %cst_11 {dimension_numbers = #tpu.dot_dimension_numbers<[1], [0], [0], [1], [0, 0, 1, 1], [], []>} : vector<8x32xf32>, vector<32x4xf32>, vector<8x4xf32> -> vector<8x4xf32>
    %40 = vector.broadcast %29 : vector<8x1xf32> to vector<8x4xf32>
    %41 = arith.mulf %39, %40 : vector<8x4xf32>
    %cst_12 = arith.constant dense<0.000000e+00> : vector<8x32xf32>
    %42 = tpu.matmul %31, %7, %cst_12 {dimension_numbers = #tpu.dot_dimension_numbers<[1], [0], [0], [1], [0, 0, 1, 1], [], []>} : vector<8x4xf32>, vector<4x32xf32>, vector<8x32xf32> -> vector<8x32xf32>
    %cst_13 = arith.constant dense<0.000000e+00> : vector<8x32xf32>
    %43 = tpu.matmul %22, %7, %cst_13 {dimension_numbers = #tpu.dot_dimension_numbers<[1], [0], [0], [1], [0, 0, 1, 1], [], []>} : vector<8x4xf32>, vector<4x32xf32>, vector<8x32xf32> -> vector<8x32xf32>
    %cst_14 = arith.constant 2.000000e+00 : f32
    %44 = vector.broadcast %cst_14 : f32 to vector<8x32xf32>
    %45 = arith.mulf %44, %42 : vector<8x32xf32>
    %46 = arith.addf %43, %45 : vector<8x32xf32>
    %cst_15 = arith.constant 2.000000e+00 : f32
    %47 = vector.broadcast %cst_15 : f32 to vector<8x32xf32>
    %48 = arith.mulf %47, %19 : vector<8x32xf32>
    %49 = vector.broadcast %6 : vector<1x32xf32> to vector<8x32xf32>
    %50 = arith.mulf %48, %49 : vector<8x32xf32>
    %51 = arith.subf %46, %50 : vector<8x32xf32>
    %52 = arith.mulf %36, %51 : vector<8x32xf32>
    %cst_16 = arith.constant dense<0.000000e+00> : vector<8x4xf32>
    %53 = tpu.matmul %52, %11, %cst_16 {dimension_numbers = #tpu.dot_dimension_numbers<[1], [0], [0], [1], [0, 0, 1, 1], [], []>} : vector<8x32xf32>, vector<32x4xf32>, vector<8x4xf32> -> vector<8x4xf32>
    %54 = vector.broadcast %29 : vector<8x1xf32> to vector<8x4xf32>
    %55 = arith.mulf %53, %54 : vector<8x4xf32>
    %56 = arith.addf %55, %31 : vector<8x4xf32>
    %57 = vector.broadcast %24 : vector<8x1xf32> to vector<8x4xf32>
    %58 = arith.mulf %31, %57 : vector<8x4xf32>
    %59 = arith.addf %58, %23 : vector<8x4xf32>
    %60 = arith.mulf %59, %59 : vector<8x4xf32>
    %cst_17 = arith.constant dense<0.000000e+00> : vector<8xf32>
    %61 = vector.multi_reduction <add>, %60, %cst_17 [1] : vector<8x4xf32> to vector<8xf32>
    %62 = vector.shape_cast %61 : vector<8xf32> to vector<8x1xf32>
    %cst_18 = arith.constant 5.000000e-01 : f32
    %63 = vector.broadcast %cst_18 : f32 to vector<8x1xf32>
    %64 = arith.mulf %63, %62 : vector<8x1xf32>
    %65 = arith.subf %33, %27 : vector<8x4xf32>
    %66 = math.absf %65 : vector<8x4xf32>
    %cst_19 = arith.constant dense<0.000000e+00> : vector<8xf32>
    %67 = vector.multi_reduction <add>, %66, %cst_19 [1] : vector<8x4xf32> to vector<8xf32>
    %68 = vector.shape_cast %67 : vector<8xf32> to vector<8x1xf32>
    %cst_20 = arith.constant 4.000000e+00 : f32
    %69 = vector.broadcast %cst_20 : f32 to vector<8x1xf32>
    %70 = arith.divf %68, %69 : vector<8x1xf32>
    %cst_21 = arith.constant 1.000000e+00 : f32
    %71 = vector.broadcast %cst_21 : f32 to vector<8x1xf32>
    %72 = arith.mulf %71, %70 : vector<8x1xf32>
    %cst_22 = arith.constant 5.000000e-01 : f32
    %73 = vector.broadcast %cst_22 : f32 to vector<8x1xf32>
    %74 = arith.mulf %73, %26 : vector<8x1xf32>
    %75 = vector.broadcast %74 : vector<8x1xf32> to vector<8x4xf32>
    %76 = arith.mulf %75, %56 : vector<8x4xf32>
    %77 = arith.subf %41, %76 : vector<8x4xf32>
    %78 = math.absf %77 : vector<8x4xf32>
    %cst_23 = arith.constant dense<0.000000e+00> : vector<8xf32>
    %79 = vector.multi_reduction <add>, %78, %cst_23 [1] : vector<8x4xf32> to vector<8xf32>
    %80 = vector.shape_cast %79 : vector<8xf32> to vector<8x1xf32>
    %cst_24 = arith.constant 4.000000e+00 : f32
    %81 = vector.broadcast %cst_24 : f32 to vector<8x1xf32>
    %82 = arith.divf %80, %81 : vector<8x1xf32>
    %cst_25 = arith.constant 1.000000e+00 : f32
    %83 = vector.broadcast %cst_25 : f32 to vector<8x1xf32>
    %84 = arith.mulf %83, %82 : vector<8x1xf32>
    %cst_26 = arith.constant dense<0.000000e+00> : vector<1xf32>
    %85 = vector.multi_reduction <add>, %64, %cst_26 [0] : vector<8x1xf32> to vector<1xf32>
    %86 = vector.shape_cast %85 : vector<1xf32> to vector<1x1xf32>
    %cst_27 = arith.constant 1.250000e-01 : f32
    %87 = vector.broadcast %cst_27 : f32 to vector<1x1xf32>
    %88 = arith.mulf %86, %87 : vector<1x1xf32>
    %cst_28 = arith.constant dense<0.000000e+00> : vector<1xf32>
    %89 = vector.multi_reduction <add>, %72, %cst_28 [0] : vector<8x1xf32> to vector<1xf32>
    %90 = vector.shape_cast %89 : vector<1xf32> to vector<1x1xf32>
    %cst_29 = arith.constant 1.250000e-01 : f32
    %91 = vector.broadcast %cst_29 : f32 to vector<1x1xf32>
    %92 = arith.mulf %90, %91 : vector<1x1xf32>
    %cst_30 = arith.constant dense<0.000000e+00> : vector<1xf32>
    %93 = vector.multi_reduction <add>, %84, %cst_30 [0] : vector<8x1xf32> to vector<1xf32>
    %94 = vector.shape_cast %93 : vector<1xf32> to vector<1x1xf32>
    %cst_31 = arith.constant 1.250000e-01 : f32
    %95 = vector.broadcast %cst_31 : f32 to vector<1x1xf32>
    %96 = arith.mulf %94, %95 : vector<1x1xf32>
    %97 = arith.addf %88, %92 : vector<1x1xf32>
    %98 = arith.addf %97, %96 : vector<1x1xf32>
    %99 = tpu.iota {dimensions = array<i32: 1>} : vector<1x128xi32>
    %c0_i32 = arith.constant 0 : i32
    %100 = vector.broadcast %c0_i32 : i32 to vector<1x128xi32>
    %101 = arith.cmpi eq, %99, %100 : vector<1x128xi32>
    %cst_32 = arith.constant 0.000000e+00 : f32
    %102 = vector.shape_cast %98 : vector<1x1xf32> to vector<1x1xf32>
    %103 = vector.broadcast %102 : vector<1x1xf32> to vector<1x128xf32>
    %104 = vector.broadcast %cst_32 : f32 to vector<1x128xf32>
    %105 = arith.select %101, %103, %104 : vector<1x128xi1>, vector<1x128xf32>
    %c1_i32 = arith.constant 1 : i32
    %106 = vector.broadcast %c1_i32 : i32 to vector<1x128xi32>
    %107 = arith.cmpi eq, %99, %106 : vector<1x128xi32>
    %cst_33 = arith.constant 0.000000e+00 : f32
    %108 = vector.shape_cast %96 : vector<1x1xf32> to vector<1x1xf32>
    %109 = vector.broadcast %108 : vector<1x1xf32> to vector<1x128xf32>
    %110 = vector.broadcast %cst_33 : f32 to vector<1x128xf32>
    %111 = arith.select %107, %109, %110 : vector<1x128xi1>, vector<1x128xf32>
    %112 = arith.addf %105, %111 : vector<1x128xf32>
    %c2_i32 = arith.constant 2 : i32
    %113 = vector.broadcast %c2_i32 : i32 to vector<1x128xi32>
    %114 = arith.cmpi eq, %99, %113 : vector<1x128xi32>
    %cst_34 = arith.constant 0.000000e+00 : f32
    %115 = vector.shape_cast %92 : vector<1x1xf32> to vector<1x1xf32>
    %116 = vector.broadcast %115 : vector<1x1xf32> to vector<1x128xf32>
    %117 = vector.broadcast %cst_34 : f32 to vector<1x128xf32>
    %118 = arith.select %114, %116, %117 : vector<1x128xi1>, vector<1x128xf32>
    %119 = arith.addf %112, %118 : vector<1x128xf32>
    %c3_i32 = arith.constant 3 : i32
    %120 = vector.broadcast %c3_i32 : i32 to vector<1x128xi32>
    %121 = arith.cmpi eq, %99, %120 : vector<1x128xi32>
    %cst_35 = arith.constant 0.000000e+00 : f32
    %122 = vector.shape_cast %88 : vector<1x1xf32> to vector<1x1xf32>
    %123 = vector.broadcast %122 : vector<1x1xf32> to vector<1x128xf32>
    %124 = vector.broadcast %cst_35 : f32 to vector<1x128xf32>
    %125 = arith.select %121, %123, %124 : vector<1x128xi1>, vector<1x128xf32>
    %126 = arith.addf %119, %125 : vector<1x128xf32>
    %c0_36 = arith.constant 0 : index
    %c0_37 = arith.constant 0 : index
    %127 = vector.load %arg4[%c0_36, %c0_37] : memref<1x128xf32, #tpu.memory_space<vmem>>, vector<1x128xf32>
    tpu.vector_store %arg4[%c0_36, %c0_37], %126 {strides = array<i32>} : memref<1x128xf32, #tpu.memory_space<vmem>>, vector<1x128xf32>,
    return
  }
}

</mosaic_0001>

<llo_original>
// kernel: neg.1
$region0: #{neg.1}
  #allocation0 [shape = 's32[1]{0}', space=sflag, size = 0x4, scoped, tag = 'scoped memory for neg.1']
  %s0 = inlined_call_operand.vmem [shape: f32[8,4], index: 0, kind: input, shape index: {}]
  %s1 = inlined_call_operand.vmem [shape: f32[8,4], index: 1, kind: output, shape index: {}]
  %v2 = vld [vmem:[%s0] sm:$0xff]
  %3 = xla_tuple %v2
  %4 = xla_tuple %3
  %v5 = vxor.u32 %v2, 2147483648
  %6 = xla_tuple %v5
  %7 = vst [vmem:[%s1] sm:$0xff] %v5

// kernel: pinn_loss_forward.1
$region0: #{pinn_loss_forward.1}
  #allocation0 [shape = 'u32[]', space=smem, size = 0x4, offset = 0x4, fixed_abs, tag = 'smem constant byte address 0x4 - core index']
  #allocation1 [shape = 'u32[72,128]{1,0:T(1,128)}', space=vmem, size = 0x9000, scoped, tag = 'internal scratch']
  %s0 = inlined_call_operand.vmem [shape: f32[16,8], index: 0, kind: input, shape index: {}]
  %s1 = inlined_call_operand.vmem [shape: f32[8,11], index: 1, kind: input, shape index: {}]
  %s2 = inlined_call_operand.vmem [shape: f32[14,32], index: 2, kind: input, shape index: {}]
  %s3 = inlined_call_operand.vmem [shape: f32[65,4], index: 3, kind: input, shape index: {}]
  %s4 = inlined_call_operand.vmem [shape: f32[1,128], index: 4, kind: output, shape index: {}]
  %s5 = sld [smem:[#allocation0]]
  $region26: #{pinn_loss_forward.1} parent=0
    _
  %s7 = ssub.s32 1, %s5
  %s8 = scalar_select 0, %s7, %s5
  // Predicated region
  $region2: #{pinn_loss_forward.1} parent=0 // pred_check
    _
  $region3: #{pinn_loss_forward.1} parent=0 // pred_check_branch
    %10 = sbr.rel (0) target = $region5
  $region4: #{pinn_loss_forward.1} parent=0 // pred_region
    _
  $region5: #{pinn_loss_forward.1} parent=0 // pred_fallthru
    _
  // Predicated region
  $region6: #{pinn_loss_forward.1} parent=0 // pred_check
    _
  $region7: #{pinn_loss_forward.1} parent=0 // pred_check_branch
    %12 = sbr.rel (0) target = $region9
  $region8: #{pinn_loss_forward.1} parent=0 // pred_region
    _
  $region9: #{pinn_loss_forward.1} parent=0 // pred_fallthru
    _
  // Predicated region
  $region10: #{pinn_loss_forward.1} parent=0 // pred_check
    _
  $region11: #{pinn_loss_forward.1} parent=0 // pred_check_branch
    %14 = sbr.rel (0) target = $region13
  $region12: #{pinn_loss_forward.1} parent=0 // pred_region
    _
  $region13: #{pinn_loss_forward.1} parent=0 // pred_fallthru
    _
  // Predicated region
  $region14: #{pinn_loss_forward.1} parent=0 // pred_check
    _
  $region15: #{pinn_loss_forward.1} parent=0 // pred_check_branch
    %16 = sbr.rel (0) target = $region17
  $region16: #{pinn_loss_forward.1} parent=0 // pred_region
    _
  $region17: #{pinn_loss_forward.1} parent=0 // pred_fallthru
    _
  %v17 = vld [vmem:[%s0] sm:$0xff]
  %v18 = vld [vmem:[%s0 + $0x8] sm:$0xff]
  %v19 = vld [vmem:[%s1] sm:$0xff]
  %v20 = vld [vmem:[%s2] sm:$0xff]
  %v21 = vld [vmem:[%s2 + $0x8] sm:$0x3f]
  %v22 = vld [vmem:[%s3] sm:$0xff]
  %v23 = vld [vmem:[%s3 + $0x8] sm:$0xff]
  %v24 = vld [vmem:[%s3 + $0x10] sm:$0xff]
  %v25 = vld [vmem:[%s3 + $0x18] sm:$0xff]
  %v26 = vld [vmem:[%s3 + $0x20] sm:$0xff]
  %v27 = vld [vmem:[%s3 + $0x28] sm:$0xff]
  %v28 = vld [vmem:[%s3 + $0x30] sm:$0xff]
  %v29 = vld [vmem:[%s3 + $0x38] sm:$0xff]
  %v30 = vld [vmem:[%s3 + $0x40] sm:$0x1]
  %v31 = vperm.slane %v21, 0
  %vm32 = vcmask 64512
  %v34 = vsel %vm32, %v17, 0
  %v37 = vsel %vm32, %v18, 0
  %39 = vmatpush.msra.mxu0 0.0
  %40 = vmatpush.msra.mxu0 0.0
  %41 = vmatpush.msra.mxu0 0.0
  %42 = vmatpush.msra.mxu0 0.0
  %43 = vmatpush.msra.mxu0 0.0
  %44 = vmatpush.msra.mxu0 0.0
  %45 = vmatpush.msra.mxu0 0.0
  %46 = vmatpush.msra.mxu0 0.0
  %47 = vmatpush.msra.mxu0 0.0
  %48 = vmatpush.msra.mxu0 0.0
  %49 = vmatpush.msra.mxu0 0.0
  %50 = vmatpush.msra.mxu0 0.0
  %51 = vmatpush.msra.mxu0 0.0
  %52 = vmatpush.msra.mxu0 0.0
  %53 = vmatpush.msra.mxu0 0.0
  %54 = vmatpush.msra.mxu0 %v20
  %55 = vmatmul.f32.gmra.mxu0 %v34
  %v56 = vpop.f32.mrf.mxu0
  %v57 = vadd.f32 %v31, %v56
  %58 = vmatmul.f32.gmra.mxu0 %v37
  %v59 = vpop.f32.mrf.mxu0
  %v60 = vadd.f32 %v31, %v59
  %61 = vdwg.mxu0
  %v62 = vtanh.pop %v57
  %v63 = vtanh.pop %v60
  %v64 = vperm.slane %v26, 0
  %vm65 = vcmask 261120
  %v67 = vsel %vm65, %v62, 0
  %v70 = vsel %vm65, %v63, 0
  %72 = vmatpush.msra.mxu0 0.0
  %73 = vmatpush.msra.mxu0 0.0
  %74 = vmatpush.msra.mxu0 0.0
  %75 = vmatpush.msra.mxu0 0.0
  %76 = vmatpush.msra.mxu0 0.0
  %77 = vmatpush.msra.mxu0 0.0
  %78 = vmatpush.msra.mxu0 0.0
  %79 = vmatpush.msra.mxu0 0.0
  %80 = vmatpush.msra.mxu0 0.0
  %81 = vmatpush.msra.mxu0 0.0
  %82 = vmatpush.msra.mxu0 0.0
  %83 = vmatpush.msra.mxu0 0.0
  %84 = vmatpush.msra.mxu0 %v25
  %85 = vmatpush.msra.mxu0 %v24
  %86 = vmatpush.msra.mxu0 %v23
  %87 = vmatpush.msra.mxu0 %v22
  %88 = vmatmul.f32.gmra.mxu0 %v67
  %v89 = vpop.f32.mrf.mxu0
  %v90 = vadd.f32 %v64, %v89
  %91 = vmatmul.f32.gmra.mxu0 %v70
  %v92 = vpop.f32.mrf.mxu0
  %v93 = vadd.f32 %v64, %v92
  %94 = vdwg.mxu0
  %v95 = vrcp.pop %v19
  %v96 = vmul.f32 %v19, %v95
  %v97 = vsub.f32 1.0, %v96
  %v98 = vmul.f32 %v95, %v97
  %v99 = vadd.f32 %v95, %v98
  %vm100 = vweird.f32 %v19
  %vm101 = vweird.f32 %v95
  %vm102 = vmor %vm100, %vm101
  %v103 = vsel %vm102, %v95, %v99
  %v104 = vand.u32 2147483647, %v19
  %vm105 = vcmp.eq.f32.partialorder %v104, 8.507059e+37
  %v106 = vand.u32 %v19, 2147483648
  %v107 = vor.u32 1.1754944e-38, %v106
  %v108 = vsel %vm105, %v107, %v103
  %v109 = vmul.f32 1.0, %v108
  %111 = vset.pattern.permute.xlu0 5
  %112 = vperm.xlu0 %111, %v109
  %v113 = vpop.permute.xlu0 %112
  %v115 = vmul.f32 %v93, %v113
  %v116 = vmul.f32 %v90, 3.1622777
  %v117 = vmul.f32 %v63, %v63
  %v118 = vsub.f32 1.0, %v117
  %v119 = vperm.slane %v20, 7
  %v120 = vmul.f32 %v118, %v119
  %v122 = vsel %vm65, %v120, 0
  %124 = vmatpush.msra.mxu0 0.0
  %125 = vmatpush.msra.mxu0 0.0
  %126 = vmatpush.msra.mxu0 0.0
  %127 = vmatpush.msra.mxu0 0.0
  %128 = vmatpush.msra.mxu0 0.0
  %129 = vmatpush.msra.mxu0 0.0
  %130 = vmatpush.msra.mxu0 0.0
  %131 = vmatpush.msra.mxu0 0.0
  %132 = vmatpush.msra.mxu0 0.0
  %133 = vmatpush.msra.mxu0 0.0
  %134 = vmatpush.msra.mxu0 0.0
  %135 = vmatpush.msra.mxu0 0.0
  %136 = vmatpush.msra.mxu0 %v25
  %137 = vmatpush.msra.mxu0 %v24
  %138 = vmatpush.msra.mxu0 %v23
  %139 = vmatpush.msra.mxu0 %v22
  %140 = vmatmul.f32.gmra.mxu0 %v122
  %v141 = vpop.f32.mrf.mxu0
  %v142 = vadd.f32 0.0, %v141
  %143 = vdwg.mxu0
  %v144 = vmul.f32 %v142, %v113
  %v146 = vrot.slane %v21, 2
  %vm147 = vcmask 31744
  %v149 = vsel %vm147, %v115, 0
  %vm151 = vcmask 1043456
  %v152 = vsel %vm151, %v146, 0
  %154 = vmatpush.msra.mxu0 0.0
  %155 = vmatpush.msra.mxu0 0.0
  %156 = vmatpush.msra.mxu0 0.0
  %157 = vmatpush.msra.mxu0 0.0
  %158 = vmatpush.msra.mxu0 0.0
  %159 = vmatpush.msra.mxu0 0.0
  %160 = vmatpush.msra.mxu0 0.0
  %161 = vmatpush.msra.mxu0 0.0
  %162 = vmatpush.msra.mxu0 0.0
  %163 = vmatpush.msra.mxu0 0.0
  %164 = vmatpush.msra.mxu0 0.0
  %165 = vmatpush.msra.mxu0 0.0
  %166 = vmatpush.msra.mxu0 0.0
  %167 = vmatpush.msra.mxu0 0.0
  %168 = vmatpush.msra.mxu0 0.0
  %169 = vmatpush.msra.mxu0 %v152
  %170 = vmatmul.f32.gmra.mxu0 %v149
  %v171 = vpop.f32.mrf.mxu0
  %v172 = vadd.f32 0.0, %v171
  %173 = vdwg.mxu0
  %v174 = vmul.f32 %v172, 2.0
  %v175 = vsel %vm147, %v18, 0
  %177 = vmatpush.msra.mxu0 0.0
  %178 = vmatpush.msra.mxu0 0.0
  %179 = vmatpush.msra.mxu0 0.0
  %180 = vmatpush.msra.mxu0 0.0
  %181 = vmatpush.msra.mxu0 0.0
  %182 = vmatpush.msra.mxu0 0.0
  %183 = vmatpush.msra.mxu0 0.0
  %184 = vmatpush.msra.mxu0 0.0
  %185 = vmatpush.msra.mxu0 0.0
  %186 = vmatpush.msra.mxu0 0.0
  %187 = vmatpush.msra.mxu0 0.0
  %188 = vmatpush.msra.mxu0 0.0
  %189 = vmatpush.msra.mxu0 0.0
  %190 = vmatpush.msra.mxu0 0.0
  %191 = vmatpush.msra.mxu0 0.0
  %192 = vmatpush.msra.mxu0 %v152
  %193 = vmatmul.f32.gmra.mxu0 %v175
  %v194 = vpop.f32.mrf.mxu0
  %v195 = vadd.f32 %v174, %v194
  %196 = vdwg.mxu0
  %v197 = vmul.f32 %v63, 2.0
  %v198 = vperm.slane %v21, 1
  %v199 = vmul.f32 %v197, %v198
  %v200 = vsub.f32 %v195, %v199
  %v201 = vmul.f32 %v118, %v200
  %vm207 = vcmask 1046528
  %v208 = vrot.slane %v26, 1
  %v209 = vrot.slane %v27, 1
  %v210 = vsel %vm207, %v208, %v209
  %v211 = vrot.slane %v28, 1
  %v212 = vsel %vm207, %v209, %v211
  %v213 = vrot.slane %v29, 1
  %v214 = vsel %vm207, %v211, %v213
  %v215 = vrot.slane %v30, 1
  %v216 = vsel %vm207, %v213, %v215
  %v222 = vsel %vm65, %v201, 0
  %224 = vmatpush.msra.mxu0 0.0
  %225 = vmatpush.msra.mxu0 0.0
  %226 = vmatpush.msra.mxu0 0.0
  %227 = vmatpush.msra.mxu0 0.0
  %228 = vmatpush.msra.mxu0 0.0
  %229 = vmatpush.msra.mxu0 0.0
  %230 = vmatpush.msra.mxu0 0.0
  %231 = vmatpush.msra.mxu0 0.0
  %232 = vmatpush.msra.mxu0 0.0
  %233 = vmatpush.msra.mxu0 0.0
  %234 = vmatpush.msra.mxu0 0.0
  %235 = vmatpush.msra.mxu0 0.0
  %236 = vmatpush.msra.mxu0 %v216
  %237 = vmatpush.msra.mxu0 %v214
  %238 = vmatpush.msra.mxu0 %v212
  %239 = vmatpush.msra.mxu0 %v210
  %240 = vmatmul.f32.gmra.mxu0 %v222
  %v241 = vpop.f32.mrf.mxu0
  %v242 = vadd.f32 0.0, %v241
  %243 = vdwg.mxu0
  %v244 = vmul.f32 %v242, %v113
  %v245 = vadd.f32 %v244, %v115
  %247 = vset.pattern.permute.xlu0 4
  %248 = vperm.xlu0 %247, %v19
  %v249 = vpop.permute.xlu0 %248
  %v251 = vmul.f32 %v115, %v249
  %v252 = vadd.f32 %v251, %v19
  %v253 = vmul.f32 %v252, %v252
  %v254 = vsel %vm147, %v253, 0.0
  %255 = vadd.xlane.f32.xlu0 %v254
  %v256 = vpop.xlane.xlu0 %255
  %v257 = vmul.f32 %v256, 0.5
  %258 = vrot.lane.b32.xlu0 %v19, 121
  %v259 = vpop.permute.xlu0 %258
  %v261 = vsub.f32 %v116, %v259
  %v262 = vand.u32 2147483647, %v261
  %v263 = vsel %vm147, %v262, 0.0
  %264 = vadd.xlane.f32.xlu0 %v263
  %v265 = vpop.xlane.xlu0 %264
  %v266 = vrcp.pop 4.0
  %v267 = vmul.f32 4.0, %v266
  %v268 = vsub.f32 1.0, %v267
  %v269 = vmul.f32 %v266, %v268
  %v270 = vadd.f32 %v266, %v269
  %vm271 = vweird.f32 %v266
  %v272 = vsel %vm271, %v266, %v270
  %v273 = vmul.f32 %v265, %v272
  %v274 = vmul.f32 %v19, 0.5
  %276 = vset.pattern.permute.xlu0 6
  %277 = vperm.xlu0 %276, %v274
  %v278 = vpop.permute.xlu0 %277
  %v280 = vmul.f32 %v278, %v245
  %v281 = vsub.f32 %v144, %v280
  %v282 = vand.u32 2147483647, %v281
  %v283 = vsel %vm147, %v282, 0.0
  %284 = vadd.xlane.f32.xlu0 %v283
  %v285 = vpop.xlane.xlu0 %284
  %v286 = vmul.f32 %v285, %v272
  %v287 = vrot.slane %v257, 4
  %v288 = vadd.f32 %v257, %v287
  %v289 = vrot.slane %v288, 2
  %v290 = vadd.f32 %v288, %v289
  %v291 = vrot.slane %v290, 1
  %v292 = vadd.f32 %v290, %v291
  %v293 = vmul.f32 %v292, 0.125
  %v294 = vrot.slane %v273, 4
  %v295 = vadd.f32 %v273, %v294
  %v296 = vrot.slane %v295, 2
  %v297 = vadd.f32 %v295, %v296
  %v298 = vrot.slane %v297, 1
  %v299 = vadd.f32 %v297, %v298
  %v300 = vmul.f32 %v299, 0.125
  %v301 = vrot.slane %v286, 4
  %v302 = vadd.f32 %v286, %v301
  %v303 = vrot.slane %v302, 2
  %v304 = vadd.f32 %v302, %v303
  %v305 = vrot.slane %v304, 1
  %v306 = vadd.f32 %v304, %v305
  %v307 = vmul.f32 %v306, 0.125
  %v308 = vadd.f32 %v293, %v300
  %v309 = vadd.f32 %v308, %v307
  %v310 = vlaneseq
  %v311 = vand.u32 %v310, 127
  %vm312 = vcmp.eq.s32.totalorder %v311, 0
  %v313 = vsel %vm312, %v309, 0.0
  %vm314 = vcmp.eq.s32.totalorder %v311, 1
  %v315 = vsel %vm314, %v307, 0.0
  %v316 = vadd.f32 %v313, %v315
  %vm317 = vcmp.eq.s32.totalorder %v311, 2
  %v318 = vsel %vm317, %v300, 0.0
  %v319 = vadd.f32 %v316, %v318
  %vm320 = vcmp.eq.s32.totalorder %v311, 3
  %v321 = vsel %vm320, %v293, 0.0
  %v322 = vadd.f32 %v319, %v321
  %323 = vst [vmem:[%s4] sm:$0x1] %v322
  // Predicated region
  $region18: #{pinn_loss_forward.1} parent=0 // pred_check
    _
  $region19: #{pinn_loss_forward.1} parent=0 // pred_check_branch
    %325 = sbr.rel (0) target = $region21
  $region20: #{pinn_loss_forward.1} parent=0 // pred_region
    _
  $region21: #{pinn_loss_forward.1} parent=0 // pred_fallthru
    _
  // Predicated region
  $region22: #{pinn_loss_forward.1} parent=0 // pred_check
    _
  $region23: #{pinn_loss_forward.1} parent=0 // pred_check_branch
    %327 = sbr.rel (0) target = $region25
  $region24: #{pinn_loss_forward.1} parent=0 // pred_region
    _
  $region25: #{pinn_loss_forward.1} parent=0 // pred_fallthru
    _

</llo_original>
